<compile_context>
chip_gen: v6e
topology: v6e:2x2x1
jax: 0.10.0
libtpu: 0.0.40
codegen_flags: <defaults>
</compile_context>

<pallas_src>
import functools

import jax
import jax.numpy as jnp
import numpy as np
from jax.experimental import pallas as pl
from jax.experimental.pallas import tpu as pltpu

EPS = 1e-6


@functools.lru_cache(maxsize=None)
def _hw_params():
    """(tile_budget_bytes, vmem_limit_bytes, min_parallel_h_blocks) per TPU gen."""
    try:
        vmem = int(pltpu.get_tpu_info().vmem_capacity_bytes)
    except Exception:
        vmem = 64 * 1024 * 1024  # conservative (v7x-like) default
    if vmem >= 100 * 1024 * 1024:
        # v5e / v6e: 128 MiB VMEM, single TensorCore -> big tiles, no forced H split.
        return 32 * 1024 * 1024, 64 * 1024 * 1024, 1
    # v7x-like: 64 MiB per-TC VMEM, 2 TensorCores -> modest tiles, >=2 H blocks so
    # the "parallel" H axis can be megacore-sharded.
    return 12 * 1024 * 1024, 32 * 1024 * 1024, 2


def _sublane_unit(dtype):
    bits = jnp.dtype(dtype).itemsize * 8
    if bits >= 32:
        return 8
    if bits == 16:
        return 16
    return 32


def _largest_divisor_multiple(dim, unit, cap, min_blocks=1):
    """Largest d with d | dim, unit | d, d <= cap, dim // d >= min_blocks (or None)."""
    best = None
    d = unit
    while d <= dim:
        if dim % d == 0 and d <= cap and dim // d >= min_blocks:
            best = d
        d += unit
    return best


def _pick_tiles(c, h, lane_dim, x_sz, t_sz, unit, tile_budget, min_h_blocks):
    """Choose (th, tl) so double-buffered inputs stay under the tile budget."""
    per_elem = 2 * (c * x_sz + t_sz)               # double-buffered input bytes / elem
    elem_budget = max(tile_budget // per_elem, unit * 128)

    h_aligned = (h % unit == 0)
    th_min = unit if h_aligned else h

    if lane_dim % 128 == 0:                        # lane-dense tile (multiple of 128)
        tl_cap = max(128, elem_budget // th_min)
        tl = _largest_divisor_multiple(lane_dim, 128, tl_cap) or lane_dim
    else:
        tl = lane_dim                              # block dim == array dim (legal)

    if h_aligned:
        th_cap = max(unit, elem_budget // tl)      # enforce budget via th in fallback
        th = _largest_divisor_multiple(h, unit, th_cap, min_blocks=min_h_blocks)
        if th is None:
            th = _largest_divisor_multiple(h, unit, th_cap, min_blocks=1)
        if th is None:
            th = unit
    else:
        # TODO(synk): pad H to a multiple of `unit` and mask pad rows if unaligned-H
        # volumes ever get large enough to blow the VMEM budget with a full-H block.
        th = h
    return th, tl


def _dice_partial_kernel(x_ref, t_ref, acc_ref, *, num_classes, sig, acc_lanes,
                         binary_target):
    """One (C, th, tl) tile: fused argmax+sigmoid, lane-dense dice partial sums."""
    first_step = (pl.program_id(1) == 0) & (pl.program_id(2) == 0)

    @pl.when(first_step)
    def _init():
        acc_ref[...] = jnp.zeros_like(acc_ref)

    # torch.argmax(dim=1) keeps the FIRST maximal index (strict '>').  sigmoid of
    # that index takes only C distinct values, so carry sigmoid(c) as a constant
    # payload: 3 VPU ops/class, zero transcendentals.  Compares run in the native
    # input dtype (f32 or bf16); the payload stays f32.
    best_val = x_ref[0]                                    # (th, tl)
    best_s = jnp.full(best_val.shape, sig[0], dtype=jnp.float32)
    for c in range(1, num_classes):                        # small static C -> unrolled
        v = x_ref[c]
        take = v > best_val
        best_val = jnp.where(take, v, best_val)
        best_s = jnp.where(take, jnp.float32(sig[c]), best_s)

    t = t_ref[0].astype(jnp.float32)                       # cast AFTER the VMEM load
    tl = t.shape[-1]

    def fold(p):
        # Static, lane-aligned 128-wide column folds (pure VPU adds, no XLU).
        parts = [p[:, g * acc_lanes:(g + 1) * acc_lanes] for g in range(tl // acc_lanes)]
        while len(parts) > 1:
            nxt = [parts[a] + parts[a + 1] for a in range(0, len(parts) - 1, 2)]
            if len(parts) % 2:
                nxt.append(parts[-1])
            parts = nxt
        return parts[0]

    # Full-width (unmasked) RMW stores into the resident merged accumulator.
    acc_ref[0] += fold(best_s * t)                         # intersect partials
    acc_ref[1] += fold(best_s * best_s)                    # sum s^2 partials
    acc_ref[2] += fold(t if binary_target else t * t)      # sum t^2 partials


@functools.partial(jax.jit, static_argnames=("binary_target",))
def abstract_dice_loss(x, target, binary_target=False):
    """x: (N, C, H, W) logits (f32/bf16), target: (N, H, W) any dtype -> scalar f32."""
    n, c, h, w = x.shape
    assert target.shape == (n, h, w)

    tile_budget, vmem_limit, min_h_blocks = _hw_params()
    x_sz = jnp.dtype(x.dtype).itemsize
    t_sz = jnp.dtype(target.dtype).itemsize
    unit = max(_sublane_unit(x.dtype), _sublane_unit(target.dtype))

    if w % 128 == 0:
        # Lane-dense W: zero-copy NCHW view, N stays a reduction grid axis.
        lane_dim = w
        x_arr = x.reshape(n * c, h, w)                     # (N*C, H, W)
        t_arr = target                                     # (N, H, W)
        nb = n
    else:
        # Narrow / unaligned W: one-time transpose to the reference (C, H, N*W)
        # layout so the trailing axis is as lane-dense as the problem allows.
        lane_dim = n * w
        x_arr = jnp.transpose(x, (1, 2, 0, 3)).reshape(c, h, lane_dim)
        t_arr = jnp.transpose(target, (1, 0, 2)).reshape(1, h, lane_dim)
        nb = 1

    th, tl = _pick_tiles(c, h, lane_dim, x_sz, t_sz, unit, tile_budget, min_h_blocks)
    acc_lanes = 128 if tl % 128 == 0 else tl
    grid = (h // th, nb, lane_dim // tl)

    # Trace-time constants: sigmoid(class index) for each class.
    sig = tuple(float(1.0 / (1.0 + np.exp(np.float32(-k)))) for k in range(c))

    kernel = functools.partial(_dice_partial_kernel, num_classes=c, sig=sig,
                               acc_lanes=acc_lanes, binary_target=binary_target)

    flops = (3 * (c - 1) + 6) * n * h * w                  # selects + products + adds
    bytes_accessed = (c * x_sz + t_sz) * n * h * w + 3 * h * acc_lanes * 4

    acc = pl.pallas_call(
        kernel,
        out_shape=jax.ShapeDtypeStruct((3, h, acc_lanes), jnp.float32),
        grid_spec=pltpu.PrefetchScalarGridSpec(
            num_scalar_prefetch=0,
            grid=grid,
            in_specs=[
                # All C channels of one sample (or of the transposed layout) for
                # H-tile i and lane-tile k.
                pl.BlockSpec((c, th, tl), lambda i, j, k: (j, i, k)),
                pl.BlockSpec((1, th, tl), lambda i, j, k: (j, i, k)),
            ],
            # Merged resident accumulator: one lane-dense block per H tile.
            out_specs=pl.BlockSpec((3, th, acc_lanes), lambda i, j, k: (0, i, 0)),
        ),
        compiler_params=pltpu.CompilerParams(
            dimension_semantics=("parallel", "arbitrary", "arbitrary"),
            vmem_limit_bytes=vmem_limit,
        ),
        cost_estimate=pl.CostEstimate(
            flops=flops, transcendentals=0, bytes_accessed=bytes_accessed),
    )(x_arr, t_arr)

    # Tiny (3, H, acc_lanes) epilogue in plain JAX: final lane reduce, then the
    # repo's 2 * intersect / clamp(denominator, min=eps) and 1 - mean(dice).
    intersect = jnp.sum(acc[0], axis=-1)
    denom = jnp.sum(acc[1], axis=-1) + jnp.sum(acc[2], axis=-1)
    dice = 2.0 * intersect / jnp.maximum(denom, EPS)
    return 1.0 - jnp.mean(dice)


def _reference(x, target):
    """Pure-JAX mirror of the PyTorch forward (with the repo's standard dice)."""
    a = jnp.argmax(x, axis=1).astype(jnp.float32)          # (N, H, W)
    s = jax.nn.sigmoid(a)
    ch = s.shape[1]                                        # "channel" axis = H
    sf = jnp.transpose(s, (1, 0, 2)).reshape(ch, -1)
    tf = jnp.transpose(target.astype(jnp.float32), (1, 0, 2)).reshape(ch, -1)
    inter = jnp.sum(sf * tf, axis=-1)
    denom = jnp.sum(sf * sf, axis=-1) + jnp.sum(tf * tf, axis=-1)
    dice = 2.0 * inter / jnp.maximum(denom, EPS)
    return 1.0 - jnp.mean(dice)


if __name__ == "__main__":
    key = jax.random.PRNGKey(0)
    k1, k2 = jax.random.split(key)
    N, C, H, W = 2, 4, 16, 16

    x = jax.random.normal(k1, (N, C, H, W), dtype=jnp.float32)
    target = (jax.random.uniform(k2, (N, H, W)) > 0.5).astype(jnp.float32)

    loss = jax.block_until_ready(abstract_dice_loss(x, target))
    ref = jax.block_until_ready(_reference(x, target))
    np.testing.assert_allclose(np.asarray(loss), np.asarray(ref), rtol=1e-5, atol=1e-5)

    print("KERNEL_OK")
</pallas_src>

<mosaic_0001>
module attributes {stable_mosaic.version = 11 : i64} {
  func.func @_dice_partial_kernel(%arg0: i32, %arg1: i32, %arg2: i32, %arg3: memref<4x8x32xf32, #tpu.memory_space<vmem>>, %arg4: memref<1x8x32xf32, #tpu.memory_space<vmem>>, %arg5: memref<3x8x32xf32, #tpu.memory_space<vmem>>) attributes {dimension_semantics = [#tpu.dimension_semantics<parallel>, #tpu.dimension_semantics<arbitrary>, #tpu.dimension_semantics<arbitrary>], iteration_bounds = array<i64: 2, 1, 1>, scalar_prefetch = 0 : i64, scratch_operands = 0 : i64, tpu.core_type = #tpu.core_type<tc>, window_params = [{transform_indices = @transform_0, window_bounds = array<i64: 4, 8, 32>}, {transform_indices = @transform_1, window_bounds = array<i64: 1, 8, 32>}, {transform_indices = @transform_2, window_bounds = array<i64: 3, 8, 32>}]} {
    %c0_i32 = arith.constant 0 : i32
    %0 = arith.cmpi eq, %arg1, %c0_i32 : i32
    %c0_i32_0 = arith.constant 0 : i32
    %1 = arith.cmpi eq, %arg2, %c0_i32_0 : i32
    %2 = arith.andi %0, %1 : i1
    %3 = arith.extui %2 : i1 to i32
    %c0_i32_1 = arith.constant 0 : i32
    %4 = arith.cmpi ne, %3, %c0_i32_1 : i32
    scf.if %4 {
      %cst_34 = arith.constant 0.000000e+00 : f32
      %48 = vector.broadcast %cst_34 : f32 to vector<3x8x32xf32>
      %c0_35 = arith.constant 0 : index
      %c0_36 = arith.constant 0 : index
      %c0_37 = arith.constant 0 : index
      %49 = vector.load %arg5[%c0_35, %c0_36, %c0_37] : memref<3x8x32xf32, #tpu.memory_space<vmem>>, vector<3x8x32xf32>
      tpu.vector_store %arg5[%c0_35, %c0_36, %c0_37], %48 {strides = array<i32>} : memref<3x8x32xf32, #tpu.memory_space<vmem>>, vector<3x8x32xf32>,
    } else {
    }
    %c0 = arith.constant 0 : index
    %c0_2 = arith.constant 0 : index
    %c0_3 = arith.constant 0 : index
    %5 = vector.load %arg3[%c0, %c0_2, %c0_3] : memref<4x8x32xf32, #tpu.memory_space<vmem>>, vector<1x8x32xf32>
    %6 = vector.shape_cast %5 : vector<1x8x32xf32> to vector<8x32xf32>
    %cst = arith.constant 5.000000e-01 : f32
    %7 = vector.broadcast %cst : f32 to vector<8x32xf32>
    %c1 = arith.constant 1 : index
    %c0_4 = arith.constant 0 : index
    %c0_5 = arith.constant 0 : index
    %8 = vector.load %arg3[%c1, %c0_4, %c0_5] : memref<4x8x32xf32, #tpu.memory_space<vmem>>, vector<1x8x32xf32>
    %9 = vector.shape_cast %8 : vector<1x8x32xf32> to vector<8x32xf32>
    %10 = arith.cmpf ogt, %9, %6 : vector<8x32xf32>
    %11 = arith.select %10, %9, %6 : vector<8x32xi1>, vector<8x32xf32>
    %cst_6 = arith.constant 0.731058597 : f32
    %12 = vector.broadcast %cst_6 : f32 to vector<8x32xf32>
    %13 = arith.select %10, %12, %7 : vector<8x32xi1>, vector<8x32xf32>
    %c2 = arith.constant 2 : index
    %c0_7 = arith.constant 0 : index
    %c0_8 = arith.constant 0 : index
    %14 = vector.load %arg3[%c2, %c0_7, %c0_8] : memref<4x8x32xf32, #tpu.memory_space<vmem>>, vector<1x8x32xf32>
    %15 = vector.shape_cast %14 : vector<1x8x32xf32> to vector<8x32xf32>
    %16 = arith.cmpf ogt, %15, %11 : vector<8x32xf32>
    %17 = arith.select %16, %15, %11 : vector<8x32xi1>, vector<8x32xf32>
    %cst_9 = arith.constant 8.807970e-01 : f32
    %18 = vector.broadcast %cst_9 : f32 to vector<8x32xf32>
    %19 = arith.select %16, %18, %13 : vector<8x32xi1>, vector<8x32xf32>
    %c3 = arith.constant 3 : index
    %c0_10 = arith.constant 0 : index
    %c0_11 = arith.constant 0 : index
    %20 = vector.load %arg3[%c3, %c0_10, %c0_11] : memref<4x8x32xf32, #tpu.memory_space<vmem>>, vector<1x8x32xf32>
    %21 = vector.shape_cast %20 : vector<1x8x32xf32> to vector<8x32xf32>
    %22 = arith.cmpf ogt, %21, %17 : vector<8x32xf32>
    %cst_12 = arith.constant 0.952574133 : f32
    %23 = vector.broadcast %cst_12 : f32 to vector<8x32xf32>
    %24 = arith.select %22, %23, %19 : vector<8x32xi1>, vector<8x32xf32>
    %c0_13 = arith.constant 0 : index
    %c0_14 = arith.constant 0 : index
    %c0_15 = arith.constant 0 : index
    %25 = vector.load %arg4[%c0_13, %c0_14, %c0_15] : memref<1x8x32xf32, #tpu.memory_space<vmem>>, vector<1x8x32xf32>
    %26 = vector.shape_cast %25 : vector<1x8x32xf32> to vector<8x32xf32>
    %c0_16 = arith.constant 0 : index
    %c0_17 = arith.constant 0 : index
    %c0_18 = arith.constant 0 : index
    %27 = vector.load %arg5[%c0_16, %c0_17, %c0_18] : memref<3x8x32xf32, #tpu.memory_space<vmem>>, vector<1x8x32xf32>
    %28 = vector.shape_cast %27 : vector<1x8x32xf32> to vector<8x32xf32>
    %29 = arith.mulf %24, %26 : vector<8x32xf32>
    %30 = arith.addf %28, %29 : vector<8x32xf32>
    %c0_19 = arith.constant 0 : index
    %c0_20 = arith.constant 0 : index
    %c0_21 = arith.constant 0 : index
    %31 = vector.load %arg5[%c0_19, %c0_20, %c0_21] : memref<3x8x32xf32, #tpu.memory_space<vmem>>, vector<1x8x32xf32>
    %32 = vector.shape_cast %31 : vector<1x8x32xf32> to vector<8x32xf32>
    %33 = vector.shape_cast %30 : vector<8x32xf32> to vector<1x8x32xf32>
    tpu.vector_store %arg5[%c0_19, %c0_20, %c0_21], %33 {strides = array<i32>} : memref<3x8x32xf32, #tpu.memory_space<vmem>>, vector<1x8x32xf32>,
    %c1_22 = arith.constant 1 : index
    %c0_23 = arith.constant 0 : index
    %c0_24 = arith.constant 0 : index
    %34 = vector.load %arg5[%c1_22, %c0_23, %c0_24] : memref<3x8x32xf32, #tpu.memory_space<vmem>>, vector<1x8x32xf32>
    %35 = vector.shape_cast %34 : vector<1x8x32xf32> to vector<8x32xf32>
    %36 = arith.mulf %24, %24 : vector<8x32xf32>
    %37 = arith.addf %35, %36 : vector<8x32xf32>
    %c1_25 = arith.constant 1 : index
    %c0_26 = arith.constant 0 : index
    %c0_27 = arith.constant 0 : index
    %38 = vector.load %arg5[%c1_25, %c0_26, %c0_27] : memref<3x8x32xf32, #tpu.memory_space<vmem>>, vector<1x8x32xf32>
    %39 = vector.shape_cast %38 : vector<1x8x32xf32> to vector<8x32xf32>
    %40 = vector.shape_cast %37 : vector<8x32xf32> to vector<1x8x32xf32>
    tpu.vector_store %arg5[%c1_25, %c0_26, %c0_27], %40 {strides = array<i32>} : memref<3x8x32xf32, #tpu.memory_space<vmem>>, vector<1x8x32xf32>,
    %c2_28 = arith.constant 2 : index
    %c0_29 = arith.constant 0 : index
    %c0_30 = arith.constant 0 : index
    %41 = vector.load %arg5[%c2_28, %c0_29, %c0_30] : memref<3x8x32xf32, #tpu.memory_space<vmem>>, vector<1x8x32xf32>
    %42 = vector.shape_cast %41 : vector<1x8x32xf32> to vector<8x32xf32>
    %43 = arith.mulf %26, %26 : vector<8x32xf32>
    %44 = arith.addf %42, %43 : vector<8x32xf32>
    %c2_31 = arith.constant 2 : index
    %c0_32 = arith.constant 0 : index
    %c0_33 = arith.constant 0 : index
    %45 = vector.load %arg5[%c2_31, %c0_32, %c0_33] : memref<3x8x32xf32, #tpu.memory_space<vmem>>, vector<1x8x32xf32>
    %46 = vector.shape_cast %45 : vector<1x8x32xf32> to vector<8x32xf32>
    %47 = vector.shape_cast %44 : vector<8x32xf32> to vector<1x8x32xf32>
    tpu.vector_store %arg5[%c2_31, %c0_32, %c0_33], %47 {strides = array<i32>} : memref<3x8x32xf32, #tpu.memory_space<vmem>>, vector<1x8x32xf32>,
    return
  }
  func.func @transform_0(%arg0: i32, %arg1: i32, %arg2: i32) -> (i32, i32, i32) {
    %c0_i32 = arith.constant 0 : i32
    return %arg1, %arg0, %arg2 : i32, i32, i32
  }
  func.func @transform_1(%arg0: i32, %arg1: i32, %arg2: i32) -> (i32, i32, i32) {
    %c0_i32 = arith.constant 0 : i32
    return %arg1, %arg0, %arg2 : i32, i32, i32
  }
  func.func @transform_2(%arg0: i32, %arg1: i32, %arg2: i32) -> (i32, i32, i32) {
    %c0_i32 = arith.constant 0 : i32
    %c0_i32_0 = arith.constant 0 : i32
    %c0_i32_1 = arith.constant 0 : i32
    return %c0_i32, %arg0, %c0_i32_0 : i32, i32, i32
  }
}

</mosaic_0001>

<llo_original>
// kernel: abstract_dice_loss.1
$region0: #{abstract_dice_loss.1}
  #allocation0 [shape = 'u32[]', space=smem, size = 0x4, offset = 0x4, fixed_abs, tag = 'smem constant byte address 0x4 - core index']
  #allocation1 [shape = 'u32[144,128]{1,0:T(1,128)}', space=vmem, size = 0x12000, scoped, tag = 'internal scratch']
  %s0 = inlined_call_operand.vmem [shape: f32[4,16,32], index: 0, kind: input, shape index: {}]
  %s1 = inlined_call_operand.vmem [shape: f32[1,16,32], index: 1, kind: input, shape index: {}]
  %s2 = inlined_call_operand.vmem [shape: f32[3,16,32], index: 2, kind: output, shape index: {}]
  %s3 = sld [smem:[#allocation0]]
  $region117: #{abstract_dice_loss.1} parent=0
    _
  %s5 = ssub.s32 1, %s3
  %s6 = scalar_select 0, %s5, %s3
  $region1: #{abstract_dice_loss.1} parent=0
    #allocation2 [shape = 'u8[32768]{0}', space=vmem, size = 0x8000, scoped, tag = 'input window, operand 0']
    #allocation3 [shape = 'u8[24576]{0}', space=vmem, size = 0x6000, scoped, tag = 'output window, operand 0']
    loop: start=0, step=1, limit=4
    $region2: #{abstract_dice_loss.1} parent=1 // loop_pre_header
      _
    $region3: #{abstract_dice_loss.1} parent=1 // loop_header
      %s8 = sphi 0, %s12
      %p9 = scmp.ge.s32.totalorder %s8, 4
      %s15 = sphi 0, %s34
      %s16 = sphi 0, %s30
      %s17 = sphi 0, %s26
      %s18 = sphi 0, %s15
      %s19 = sphi 0, %s16
      %s20 = sphi 0, %s17
      %s21 = sphi 0, %s18
      %s22 = sphi 0, %s19
      %s23 = sphi 0, %s20
      %s41 = sphi 0, %s43
      %s44 = sphi 0, %s41
      %s45 = sphi 0, %s44
      %s61 = sphi 0, %s45
      %s71 = sphi 0, %s73
      %s74 = sphi 0, %s71
      %s75 = sphi 0, %s74
      %s91 = sphi 0, %s75
      %s97 = sphi 0, %s99
      %s100 = sphi 0, %s97
      %s101 = sphi 0, %s100
      %s117 = sphi 0, %s101
    $region4: #{abstract_dice_loss.1} parent=1 // loop_header_branch
      %11 = sbr.rel (%p9) target = $region8
    $region5: #{abstract_dice_loss.1} parent=1 // loop_body
      %s13 = ssub.s32 %s8, 1
      %s14 = ssub.s32 %s8, 2
      %s24 = sadd.s32 1, %s17
      %p25 = scmp.ge.s32.totalorder %s24, 1
      %s26 = scalar_select %p25, 0, %s24
      %s27 = sadd.s32 1, %s16
      %s28 = scalar_select %p25, %s27, %s16
      %p29 = scmp.ge.s32.totalorder %s28, 1
      %s30 = scalar_select %p29, 0, %s28
      %s31 = sadd.s32 1, %s15
      %s32 = scalar_select %p29, %s31, %s15
      %p33 = scmp.ge.s32.totalorder %s32, 2
      %s34 = scalar_select %p33, 0, %s32
      %s35 = ssub.s32 %s16, %s30
      %s36 = ssub.s32 %s15, %s34
      %s37 = sor.u32 %s35, %s36
      %s38 = ssub.s32 %s17, %s26
      %s39 = sor.u32 %s37, %s38
      %p40 = scmp.eq.s32.totalorder %s39, 0
      %s42 = sadd.s32 %s41, 1
      %s43 = scalar_select %p40, %s41, %s42
      %p46 = pneg %p40
      %p47 = scmp.eq.s32.totalorder %s8, 1
      %p48 = por %p46, %p47
      %p49 = scmp.ne.s32.totalorder %s41, %s44
      %p50 = scmp.eq.s32.totalorder %s8, 0
      %p51 = por %p49, %p50
      %p52 = scmp.ne.s32.totalorder %s41, %s44
      %p53 = scmp.eq.s32.totalorder %s13, 1
      %p54 = por %p52, %p53
      %p55 = scmp.ne.s32.totalorder %s44, %s45
      %p56 = scmp.eq.s32.totalorder %s13, 0
      %p57 = por %p55, %p56
      %p58 = scmp.ne.s32.totalorder %s44, %s45
      %p59 = scmp.eq.s32.totalorder %s14, 1
      %p60 = por %p58, %p59
      %p62 = scmp.ne.s32.totalorder %s45, %s61
      %p63 = scmp.eq.s32.totalorder %s14, 0
      %p64 = por %p62, %p63
      %s65 = ssub.s32 %s16, %s30
      %s66 = ssub.s32 %s15, %s34
      %s67 = sor.u32 %s65, %s66
      %s68 = ssub.s32 %s17, %s26
      %s69 = sor.u32 %s67, %s68
      %p70 = scmp.eq.s32.totalorder %s69, 0
      %s72 = sadd.s32 %s71, 1
      %s73 = scalar_select %p70, %s71, %s72
      %p76 = pneg %p70
      %p77 = scmp.eq.s32.totalorder %s8, 1
      %p78 = por %p76, %p77
      %p79 = scmp.ne.s32.totalorder %s71, %s74
      %p80 = scmp.eq.s32.totalorder %s8, 0
      %p81 = por %p79, %p80
      %p82 = scmp.ne.s32.totalorder %s71, %s74
      %p83 = scmp.eq.s32.totalorder %s13, 1
      %p84 = por %p82, %p83
      %p85 = scmp.ne.s32.totalorder %s74, %s75
      %p86 = scmp.eq.s32.totalorder %s13, 0
      %p87 = por %p85, %p86
      %p88 = scmp.ne.s32.totalorder %s74, %s75
      %p89 = scmp.eq.s32.totalorder %s14, 1
      %p90 = por %p88, %p89
      %p92 = scmp.ne.s32.totalorder %s75, %s91
      %p93 = scmp.eq.s32.totalorder %s14, 0
      %p94 = por %p92, %p93
      %s95 = ssub.s32 %s15, %s34
      %p96 = scmp.eq.s32.totalorder %s95, 0
      %s98 = sadd.s32 %s97, 1
      %s99 = scalar_select %p96, %s97, %s98
      %p102 = pneg %p96
      %p103 = scmp.eq.s32.totalorder %s8, 1
      %p104 = por %p102, %p103
      %p105 = scmp.ne.s32.totalorder %s97, %s100
      %p106 = scmp.eq.s32.totalorder %s8, 0
      %p107 = por %p105, %p106
      %p108 = scmp.ne.s32.totalorder %s97, %s100
      %p109 = scmp.eq.s32.totalorder %s13, 1
      %p110 = por %p108, %p109
      %p111 = scmp.ne.s32.totalorder %s100, %s101
      %p112 = scmp.eq.s32.totalorder %s13, 0
      %p113 = por %p111, %p112
      %p114 = scmp.ne.s32.totalorder %s100, %s101
      %p115 = scmp.eq.s32.totalorder %s14, 1
      %p116 = por %p114, %p115
      %p118 = scmp.ne.s32.totalorder %s101, %s117
      %p119 = scmp.eq.s32.totalorder %s14, 0
      %p120 = por %p118, %p119
      %p121 = scmp.le.s32.totalorder 1, %s8
      %p122 = scmp.lt.s32.totalorder %s8, 3
      %p123 = pnand %p121, %p122
      %p124 = pneg %p123
      // Predicated region
      $region9: #{abstract_dice_loss.1} parent=5 // pred_check
        _
      $region10: #{abstract_dice_loss.1} parent=5 // pred_check_branch
        %126 = sbr.rel (%p123) target = $region12
      $region11: #{abstract_dice_loss.1} parent=5 // pred_region
        %s127 = ssub.s32 %s8, 1
      $region12: #{abstract_dice_loss.1} parent=5 // pred_fallthru
        _
      %p128 = scmp.lt.s32.totalorder %s8, 2
      // Predicated region
      $region13: #{abstract_dice_loss.1} parent=5 // pred_check
        %p129 = pneg %p128
      $region14: #{abstract_dice_loss.1} parent=5 // pred_check_branch
        %131 = sbr.rel (%p129) target = $region16
      $region15: #{abstract_dice_loss.1} parent=5 // pred_region
        // Predicated region
        $region17: #{abstract_dice_loss.1} parent=15 // pred_check
          %p132 = pneg %p51
        $region18: #{abstract_dice_loss.1} parent=15 // pred_check_branch
          %134 = sbr.rel (%p132) target = $region20
        $region19: #{abstract_dice_loss.1} parent=15 // pred_region
          %s135 = sand.u32 %s41, 1
          %s136 = sand.u32 %s41, 1
          %s137 = smul.addr %s136, 32
          %s138 = scalar_lea.vmem [#allocation2], %s137
          %s139 = smul.u32 4, %s16
          %s140 = sadd.s32 %s17, %s15
          %s141 = smul.addr %s139, 2
          %s142 = sadd.s32 %s140, %s141
          %s143 = smul.addr %s142, 8
          %s144 = scalar_lea.vmem %s0, %s143
          // Predicated region
          $region21: #{abstract_dice_loss.1} parent=19 // pred_check
            _
          $region22: #{abstract_dice_loss.1} parent=19 // pred_check_branch
            %146 = sbr.rel (0) target = $region24
          $region23: #{abstract_dice_loss.1} parent=19 // pred_region
            // Predicated region
            $region25: #{abstract_dice_loss.1} parent=23 // pred_check
              _
            $region26: #{abstract_dice_loss.1} parent=23 // pred_check_branch
              %148 = sbr.rel (0) target = $region28
            $region27: #{abstract_dice_loss.1} parent=23 // pred_region
              // Predicated region
              $region40: #{abstract_dice_loss.1} parent=27 // pred_check
                _
              $region41: #{abstract_dice_loss.1} parent=27 // pred_check_branch
                %170 = sbr.rel (0) target = $region43
              $region42: #{abstract_dice_loss.1} parent=27 // pred_region
                loop: start=0, step=1, limit=1
                $region44: #{abstract_dice_loss.1} parent=42 // loop_pre_header
                  _
                $region45: #{abstract_dice_loss.1} parent=42 // loop_header
                  %s172 = sphi 0, %s176
                  %p173 = scmp.ge.s32.totalorder %s172, 1
                  %s177 = sphi %s144, %s144
                  %s178 = sphi %s138, %s138
                $region46: #{abstract_dice_loss.1} parent=42 // loop_header_branch
                  %175 = sbr.rel (%p173) target = $region50
                $region47: #{abstract_dice_loss.1} parent=42 // loop_body
                  %v179 = vld [vmem:[%s177] sm:$0xff]
                  %180 = vst [vmem:[%s178] sm:$0xff] %v179
                  %v181 = vld [vmem:[%s177 + $0x10] sm:$0xff]
                  %182 = vst [vmem:[%s178 + $0x8] sm:$0xff] %v181
                  %v183 = vld [vmem:[%s177 + $0x20] sm:$0xff]
                  %184 = vst [vmem:[%s178 + $0x10] sm:$0xff] %v183
                  %v185 = vld [vmem:[%s177 + $0x30] sm:$0xff]
                  %186 = vst [vmem:[%s178 + $0x18] sm:$0xff] %v185
                $region48: #{abstract_dice_loss.1} parent=42 // loop_footer
                  %s176 = sadd.s32 1, %s172
                $region49: #{abstract_dice_loss.1} parent=42 // loop_footer_branch
                  %171 = sbr.rel target = $region45
                $region50: #{abstract_dice_loss.1} parent=42 // loop_exit
                  _
              $region43: #{abstract_dice_loss.1} parent=27 // pred_fallthru
                _
              // Predicated region
              $region51: #{abstract_dice_loss.1} parent=27 // pred_check
                _
              $region52: #{abstract_dice_loss.1} parent=27 // pred_check_branch
                %188 = sbr.rel target = $region54
              $region53: #{abstract_dice_loss.1} parent=27 // pred_region
                _
              $region54: #{abstract_dice_loss.1} parent=27 // pred_fallthru
                _
            $region28: #{abstract_dice_loss.1} parent=23 // pred_fallthru
              _
            // Predicated region
            $region29: #{abstract_dice_loss.1} parent=23 // pred_check
              _
            $region30: #{abstract_dice_loss.1} parent=23 // pred_check_branch
              %150 = sbr.rel target = $region32
            $region31: #{abstract_dice_loss.1} parent=23 // pred_region
              %s152 = ssub.s32 256, 1
              loop: start=0, step=1, limit=1
              $region33: #{abstract_dice_loss.1} parent=31 // loop_pre_header
                _
              $region34: #{abstract_dice_loss.1} parent=31 // loop_header
                %s154 = sphi 0, %s158
                %p155 = scmp.ge.s32.totalorder %s154, 1
                %s159 = sphi %s144, %s144
                %s160 = sphi %s138, %s138
              $region35: #{abstract_dice_loss.1} parent=31 // loop_header_branch
                %157 = sbr.rel (%p155) target = $region39
              $region36: #{abstract_dice_loss.1} parent=31 // loop_body
                %v161 = vld [vmem:[%s159] sm:%s152]
                %162 = vst [vmem:[%s160] sm:%s152] %v161
                %v163 = vld [vmem:[%s159 + $0x10] sm:%s152]
                %164 = vst [vmem:[%s160 + $0x8] sm:%s152] %v163
                %v165 = vld [vmem:[%s159 + $0x20] sm:%s152]
                %166 = vst [vmem:[%s160 + $0x10] sm:%s152] %v165
                %v167 = vld [vmem:[%s159 + $0x30] sm:%s152]
                %168 = vst [vmem:[%s160 + $0x18] sm:%s152] %v167
              $region37: #{abstract_dice_loss.1} parent=31 // loop_footer
                %s158 = sadd.s32 1, %s154
              $region38: #{abstract_dice_loss.1} parent=31 // loop_footer_branch
                %153 = sbr.rel target = $region34
              $region39: #{abstract_dice_loss.1} parent=31 // loop_exit
                _
            $region32: #{abstract_dice_loss.1} parent=23 // pred_fallthru
              _
          $region24: #{abstract_dice_loss.1} parent=19 // pred_fallthru
            _
          %189 = vnop
        $region20: #{abstract_dice_loss.1} parent=15 // pred_fallthru
          _
        // Predicated region
        $region55: #{abstract_dice_loss.1} parent=15 // pred_check
          %p190 = pneg %p81
        $region56: #{abstract_dice_loss.1} parent=15 // pred_check_branch
          %192 = sbr.rel (%p190) target = $region58
        $region57: #{abstract_dice_loss.1} parent=15 // pred_region
          %p193 = scmp.lt.s32.totalorder %s16, 0
          %s194 = scalar_select %p193, %s16, 0
          %p195 = scmp.lt.s32.totalorder %s15, 1
          %s196 = scalar_select %p195, %s15, 1
          %p197 = scmp.lt.s32.totalorder %s17, 0
          %s198 = scalar_select %p197, %s17, 0
          %s199 = sadd.s32 %s198, %s196
          %s200 = smul.addr %s194, 2
          %s201 = sadd.s32 %s199, %s200
          %s202 = smul.addr %s201, 8
          %s203 = scalar_lea.vmem %s1, %s202
        $region58: #{abstract_dice_loss.1} parent=15 // pred_fallthru
          _
      $region16: #{abstract_dice_loss.1} parent=5 // pred_fallthru
        _
      %p204 = scmp.le.s32.totalorder 1, %s8
      %p205 = scmp.lt.s32.totalorder %s8, 3
      %p206 = pnand %p204, %p205
      %p207 = pneg %p206
      // Predicated region
      $region59: #{abstract_dice_loss.1} parent=5 // pred_check
        _
      $region60: #{abstract_dice_loss.1} parent=5 // pred_check_branch
        %209 = sbr.rel (%p206) target = $region62
      $region61: #{abstract_dice_loss.1} parent=5 // pred_region
        %s210 = ssub.s32 %s8, 1
        %s211 = sand.u32 %s44, 1
        %s212 = sand.u32 %s44, 1
        %s213 = smul.addr %s212, 32
        %s214 = scalar_lea.vmem [#allocation2], %s213
        // Predicated region
        $region63: #{abstract_dice_loss.1} parent=61 // pred_check
          %p215 = pneg %p57
        $region64: #{abstract_dice_loss.1} parent=61 // pred_check_branch
          %217 = sbr.rel (%p215) target = $region66
        $region65: #{abstract_dice_loss.1} parent=61 // pred_region
          _
        $region66: #{abstract_dice_loss.1} parent=61 // pred_fallthru
          _
        %s218 = sand.u32 %s44, 1
        %s219 = sand.u32 %s44, 1
        %s220 = smul.addr %s219, 32
        %s221 = scalar_lea.vmem [#allocation2], %s220
        %p222 = pneg %p57
        %p223 = pneg %p54
        %p224 = scmp.lt.s32.totalorder %s19, 0
        %s225 = scalar_select %p224, %s19, 0
        %p226 = scmp.lt.s32.totalorder %s18, 1
        %s227 = scalar_select %p226, %s18, 1
        %p228 = scmp.lt.s32.totalorder %s20, 0
        %s229 = scalar_select %p228, %s20, 0
        %s230 = sadd.s32 %s229, %s227
        %s231 = smul.addr %s225, 2
        %s232 = sadd.s32 %s230, %s231
        %s233 = smul.addr %s232, 8
        %s234 = scalar_lea.vmem %s1, %s233
        %p235 = pneg %p87
        %p236 = pneg %p84
        %p237 = pneg %p113
        %p238 = pneg %p110
        %s239 = sand.u32 %s100, 1
        %s240 = sand.u32 %s100, 1
        %s241 = smul.addr %s240, 24
        %s242 = scalar_lea.vmem [#allocation3], %s241
        %s243 = smul.u32 4, %s19
        %p244 = scmp.lt.s32.totalorder %s19, 0
        %s245 = scalar_select %p244, %s19, 0
        %p246 = scmp.lt.s32.totalorder %s18, 1
        %s247 = scalar_select %p246, %s18, 1
        %p248 = scmp.lt.s32.totalorder %s20, 0
        %s249 = scalar_select %p248, %s20, 0
        %s250 = sadd.s32 %s249, %s247
        %s251 = smul.addr %s245, 2
        %s252 = sadd.s32 %s250, %s251
        %s253 = smul.addr %s252, 8
        %s254 = scalar_lea.vmem %s1, %s253
        %p255 = scmp.eq.s32.totalorder %s19, 0
        %p256 = scmp.eq.s32.totalorder %s20, 0
        %p257 = pnand %p255, %p256
        %p258 = pneg %p257
        // Predicated region
        $region67: #{abstract_dice_loss.1} parent=61 // pred_check
          _
        $region68: #{abstract_dice_loss.1} parent=61 // pred_check_branch
          %260 = sbr.rel (%p257) target = $region70
        $region69: #{abstract_dice_loss.1} parent=61 // pred_region
          %vm261 = vcmask 261120
          %262 = vst.msk [vmem:[%s242] sm:$0xff] %vm261, 0.0
          %263 = vst.msk [vmem:[%s242 + $0x8] sm:$0xff] %vm261, 0.0
          %264 = vst.msk [vmem:[%s242 + $0x10] sm:$0xff] %vm261, 0.0
        $region70: #{abstract_dice_loss.1} parent=61 // pred_fallthru
          _
        %v265 = vld [vmem:[%s214] sm:$0xff]
        %s266 = scalar_lea.vmem %s214, 8 [#allocation2]
        %v267 = vld [vmem:[%s266] sm:$0xff]
        %vm268 = vcmp.gt.f32.partialorder %v267, %v265
        %v269 = vsel %vm268, %v267, %v265
        %v270 = vsel %vm268, 0.7310586, 0.5
        %s271 = scalar_lea.vmem %s214, 16 [#allocation2]
        %v272 = vld [vmem:[%s271] sm:$0xff]
        %vm273 = vcmp.gt.f32.partialorder %v272, %v269
        %v274 = vsel %vm273, %v272, %v269
        %v275 = vsel %vm273, 0.880797, %v270
        %s276 = scalar_lea.vmem %s214, 24 [#allocation2]
        %v277 = vld [vmem:[%s276] sm:$0xff]
        %vm278 = vcmp.gt.f32.partialorder %v277, %v274
        %v279 = vsel %vm278, 0.95257413, %v275
        %v280 = vld [vmem:[%s254] sm:$0xff]
        %v281 = vld [vmem:[%s242] sm:$0xff]
        %v282 = vmul.f32 %v279, %v280
        %v283 = vadd.f32 %v281, %v282
        %vm284 = vcmask 261120
        %285 = vst.msk [vmem:[%s242] sm:$0xff] %vm284, %v283
        %s286 = scalar_lea.vmem %s242, 8 [#allocation3]
        %v287 = vld [vmem:[%s286] sm:$0xff]
        %v288 = vmul.f32 %v279, %v279
        %v289 = vadd.f32 %v287, %v288
        %290 = vst.msk [vmem:[%s286] sm:$0xff] %vm284, %v289
        %s291 = scalar_lea.vmem %s242, 16 [#allocation3]
        %v292 = vld [vmem:[%s291] sm:$0xff]
        %v293 = vmul.f32 %v280, %v280
        %v294 = vadd.f32 %v292, %v293
        %295 = vst.msk [vmem:[%s291] sm:$0xff] %vm284, %v294
        %s296 = sand.u32 %s100, 1
        %s297 = sand.u32 %s100, 1
        %s298 = smul.addr %s297, 24
        %s299 = scalar_lea.vmem [#allocation3], %s298
        // Predicated region
        $region71: #{abstract_dice_loss.1} parent=61 // pred_check
          %p300 = pneg %p110
        $region72: #{abstract_dice_loss.1} parent=61 // pred_check_branch
          %302 = sbr.rel (%p300) target = $region74
        $region73: #{abstract_dice_loss.1} parent=61 // pred_region
          %s303 = smul.addr %s18, 8
          %s304 = scalar_lea.vmem %s2, %s303
          // Predicated region
          $region75: #{abstract_dice_loss.1} parent=73 // pred_check
            _
          $region76: #{abstract_dice_loss.1} parent=73 // pred_check_branch
            %306 = sbr.rel (0) target = $region78
          $region77: #{abstract_dice_loss.1} parent=73 // pred_region
            // Predicated region
            $region79: #{abstract_dice_loss.1} parent=77 // pred_check
              _
            $region80: #{abstract_dice_loss.1} parent=77 // pred_check_branch
              %308 = sbr.rel (0) target = $region82
            $region81: #{abstract_dice_loss.1} parent=77 // pred_region
              // Predicated region
              $region94: #{abstract_dice_loss.1} parent=81 // pred_check
                _
              $region95: #{abstract_dice_loss.1} parent=81 // pred_check_branch
                %328 = sbr.rel (0) target = $region97
              $region96: #{abstract_dice_loss.1} parent=81 // pred_region
                loop: start=0, step=1, limit=1
                $region98: #{abstract_dice_loss.1} parent=96 // loop_pre_header
                  _
                $region99: #{abstract_dice_loss.1} parent=96 // loop_header
                  %s330 = sphi 0, %s334
                  %p331 = scmp.ge.s32.totalorder %s330, 1
                  %s335 = sphi %s299, %s299
                  %s336 = sphi %s304, %s304
                $region100: #{abstract_dice_loss.1} parent=96 // loop_header_branch
                  %333 = sbr.rel (%p331) target = $region104
                $region101: #{abstract_dice_loss.1} parent=96 // loop_body
                  %v337 = vld [vmem:[%s335] sm:$0xff]
                  %338 = vst [vmem:[%s336] sm:$0xff] %v337
                  %v339 = vld [vmem:[%s335 + $0x8] sm:$0xff]
                  %340 = vst [vmem:[%s336 + $0x10] sm:$0xff] %v339
                  %v341 = vld [vmem:[%s335 + $0x10] sm:$0xff]
                  %342 = vst [vmem:[%s336 + $0x20] sm:$0xff] %v341
                $region102: #{abstract_dice_loss.1} parent=96 // loop_footer
                  %s334 = sadd.s32 1, %s330
                $region103: #{abstract_dice_loss.1} parent=96 // loop_footer_branch
                  %329 = sbr.rel target = $region99
                $region104: #{abstract_dice_loss.1} parent=96 // loop_exit
                  _
              $region97: #{abstract_dice_loss.1} parent=81 // pred_fallthru
                _
              // Predicated region
              $region105: #{abstract_dice_loss.1} parent=81 // pred_check
                _
              $region106: #{abstract_dice_loss.1} parent=81 // pred_check_branch
                %344 = sbr.rel target = $region108
              $region107: #{abstract_dice_loss.1} parent=81 // pred_region
                _
              $region108: #{abstract_dice_loss.1} parent=81 // pred_fallthru
                _
            $region82: #{abstract_dice_loss.1} parent=77 // pred_fallthru
              _
            // Predicated region
            $region83: #{abstract_dice_loss.1} parent=77 // pred_check
              _
            $region84: #{abstract_dice_loss.1} parent=77 // pred_check_branch
              %310 = sbr.rel target = $region86
            $region85: #{abstract_dice_loss.1} parent=77 // pred_region
              %s312 = ssub.s32 256, 1
              loop: start=0, step=1, limit=1
              $region87: #{abstract_dice_loss.1} parent=85 // loop_pre_header
                _
              $region88: #{abstract_dice_loss.1} parent=85 // loop_header
                %s314 = sphi 0, %s318
                %p315 = scmp.ge.s32.totalorder %s314, 1
                %s319 = sphi %s299, %s299
                %s320 = sphi %s304, %s304
              $region89: #{abstract_dice_loss.1} parent=85 // loop_header_branch
                %317 = sbr.rel (%p315) target = $region93
              $region90: #{abstract_dice_loss.1} parent=85 // loop_body
                %v321 = vld [vmem:[%s319] sm:%s312]
                %322 = vst [vmem:[%s320] sm:%s312] %v321
                %v323 = vld [vmem:[%s319 + $0x8] sm:%s312]
                %324 = vst [vmem:[%s320 + $0x10] sm:%s312] %v323
                %v325 = vld [vmem:[%s319 + $0x10] sm:%s312]
                %326 = vst [vmem:[%s320 + $0x20] sm:%s312] %v325
              $region91: #{abstract_dice_loss.1} parent=85 // loop_footer
                %s318 = sadd.s32 1, %s314
              $region92: #{abstract_dice_loss.1} parent=85 // loop_footer_branch
                %313 = sbr.rel target = $region88
              $region93: #{abstract_dice_loss.1} parent=85 // loop_exit
                _
            $region86: #{abstract_dice_loss.1} parent=77 // pred_fallthru
              _
          $region78: #{abstract_dice_loss.1} parent=73 // pred_fallthru
            _
          %345 = vnop
        $region74: #{abstract_dice_loss.1} parent=61 // pred_fallthru
          _
      $region62: #{abstract_dice_loss.1} parent=5 // pred_fallthru
        _
      %p346 = scmp.le.s32.totalorder 2, %s8
      // Predicated region
      $region109: #{abstract_dice_loss.1} parent=5 // pred_check
        %p347 = pneg %p346
      $region110: #{abstract_dice_loss.1} parent=5 // pred_check_branch
        %349 = sbr.rel (%p347) target = $region112
      $region111: #{abstract_dice_loss.1} parent=5 // pred_region
        %s350 = ssub.s32 %s8, 2
        // Predicated region
        $region113: #{abstract_dice_loss.1} parent=111 // pred_check
          %p351 = pneg %p116
        $region114: #{abstract_dice_loss.1} parent=111 // pred_check_branch
          %353 = sbr.rel (%p351) target = $region116
        $region115: #{abstract_dice_loss.1} parent=111 // pred_region
          %s354 = sand.u32 %s101, 1
          %s355 = sand.u32 %s101, 1
          %s356 = smul.addr %s355, 24
          %s357 = scalar_lea.vmem [#allocation3], %s356
        $region116: #{abstract_dice_loss.1} parent=111 // pred_fallthru
          _
      $region112: #{abstract_dice_loss.1} parent=5 // pred_fallthru
        _
    $region6: #{abstract_dice_loss.1} parent=1 // loop_footer
      %s12 = sadd.s32 1, %s8
    $region7: #{abstract_dice_loss.1} parent=1 // loop_footer_branch
      %7 = sbr.rel target = $region3
    $region8: #{abstract_dice_loss.1} parent=1 // loop_exit
      _

</llo_original>
